<compile_context>
chip_gen: v5e
topology: v5e:2x2
jax: 0.10.0
libtpu: 0.0.40
codegen_flags: <defaults>
</compile_context>

<pallas_src>
import functools

import jax
import jax.numpy as jnp
from jax.experimental import pallas as pl
from jax.experimental.pallas import tpu as pltpu

_LANE = 128
_SUBLANE = 8
_BLOCK_BYTE_BUDGET = 4 * 1024 * 1024  # per-buffer block target (v7x-safe)


def _copy_kernel(x_ref, o_ref):
    # The channel permutation is fully handled by the BlockSpec index maps.
    # The body is a plain VMEM copy; the reshape only rearranges leading
    # size-1 / outer dims (the minor two dims are identical), so no relayout.
    o_ref[...] = x_ref[...].reshape(o_ref.shape)


def _largest_divisor_at_most(n: int, cap: int) -> int:
    cap = max(1, min(n, cap))
    for d in range(cap, 0, -1):
        if n % d == 0:
            return d
    return 1


@functools.partial(jax.jit, static_argnums=(1,))
def channel_shuffle(x: jax.Array, groups: int) -> jax.Array:
    """Pallas implementation of ChannelShuffle.forward for NCHW input."""
    N, C, H, W = x.shape
    g = int(groups)
    assert C % g == 0, "channels must be divisible by groups"
    cpg = C // g
    HW = H * W
    itemsize = jnp.dtype(x.dtype).itemsize

    if HW % _LANE == 0:
        # ---- Lane-dense path: flatten spatial into the lane dim. ----
        row_bytes = HW * itemsize
        cpg_chunk = _largest_divisor_at_most(
            cpg, max(1, _BLOCK_BYTE_BUDGET // row_bytes))
        n_chunks = cpg // cpg_chunk

        x_v = x.reshape(N, g, cpg, HW)

        # in block: contiguous slab of cpg_chunk input channels of group r.
        in_spec = pl.BlockSpec((1, 1, cpg_chunk, HW),
                               lambda n, r, k: (n, r, k, 0))
        # out block: same slab lands at channels [k*cpg_chunk, ...) and lane
        # columns [r*HW, (r+1)*HW) of the (N, cpg, g*HW) output view.
        out_spec = pl.BlockSpec((1, cpg_chunk, HW),
                                lambda n, r, k: (n, k, r))
        out_shape = jax.ShapeDtypeStruct((N, cpg, g * HW), x.dtype)
        blk_bytes = cpg_chunk * HW * itemsize
    else:
        # ---- Fallback: keep (H, W) as full-extent minor dims (always legal,
        # narrower lanes but still slab-sized copies per grid step). ----
        row_bytes = (-(-H // _SUBLANE) * _SUBLANE) * \
                    (-(-W // _LANE) * _LANE) * itemsize
        cpg_chunk = _largest_divisor_at_most(
            cpg, max(1, _BLOCK_BYTE_BUDGET // row_bytes))
        n_chunks = cpg // cpg_chunk

        x_v = x.reshape(N, g, cpg, H, W)

        in_spec = pl.BlockSpec((1, 1, cpg_chunk, H, W),
                               lambda n, r, k: (n, r, k, 0, 0))
        out_spec = pl.BlockSpec((1, cpg_chunk, 1, H, W),
                                lambda n, r, k: (n, k, r, 0, 0))
        out_shape = jax.ShapeDtypeStruct((N, cpg, g, H, W), x.dtype)
        blk_bytes = cpg_chunk * row_bytes

    # Double-buffered input + output => ~4x block bytes; add headroom and keep
    # within the v7x scoped budget while raising v5e's 16 MiB default.
    vmem_limit = int(min(max(4 * blk_bytes + (4 << 20), 16 << 20), 32 << 20))

    out_v = pl.pallas_call(
        _copy_kernel,
        out_shape=out_shape,
        grid=(N, g, n_chunks),
        in_specs=[in_spec],
        out_specs=out_spec,
        compiler_params=pltpu.CompilerParams(
            dimension_semantics=("parallel", "parallel", "parallel"),
            vmem_limit_bytes=vmem_limit,
        ),
    )(x_v)

    return out_v.reshape(N, C, H, W)


def channel_shuffle_ref(x: jax.Array, groups: int) -> jax.Array:
    """Pure-JAX reference mirroring the PyTorch view/permute/view chain."""
    N, C, H, W = x.shape
    g = groups
    return (
        x.reshape(N, g, C // g, H, W)
        .transpose(0, 2, 1, 3, 4)
        .reshape(N, C, H, W)
    )


if __name__ == "__main__":
    key = jax.random.PRNGKey(0)

    # Main test shape (lane-dense path: H*W = 256, a multiple of 128).
    N, C, H, W = 2, 4, 16, 16
    groups = 2
    x = jax.random.normal(key, (N, C, H, W), dtype=jnp.float32)

    out = jax.block_until_ready(channel_shuffle(x, groups))
    ref = channel_shuffle_ref(x, groups)
    assert out.shape == ref.shape and out.dtype == ref.dtype
    assert jnp.array_equal(out, ref), "mismatch vs reference channel shuffle"

    # Also exercise the fallback path (H*W not a multiple of 128).
    x2 = jax.random.normal(jax.random.PRNGKey(0), (2, 4, 6, 6), dtype=jnp.float32)
    out2 = jax.block_until_ready(channel_shuffle(x2, 2))
    ref2 = channel_shuffle_ref(x2, 2)
    assert jnp.array_equal(out2, ref2), "mismatch (fallback path)"

    print("KERNEL_OK")
</pallas_src>

<mosaic_0001>
module attributes {stable_mosaic.version = 11 : i64} {
  func.func @_copy_kernel(%arg0: i32, %arg1: i32, %arg2: i32, %arg3: memref<1x1x2x256xf32, #tpu.memory_space<vmem>>, %arg4: memref<1x2x256xf32, #tpu.memory_space<vmem>>) attributes {dimension_semantics = [#tpu.dimension_semantics<parallel>, #tpu.dimension_semantics<parallel>, #tpu.dimension_semantics<parallel>], iteration_bounds = array<i64: 2, 2, 1>, scalar_prefetch = 0 : i64, scratch_operands = 0 : i64, tpu.core_type = #tpu.core_type<tc>, window_params = [{transform_indices = @transform_0, window_bounds = array<i64: 1, 1, 2, 256>}, {transform_indices = @transform_1, window_bounds = array<i64: 1, 2, 256>}]} {
    %c0 = arith.constant 0 : index
    %c0_0 = arith.constant 0 : index
    %c0_1 = arith.constant 0 : index
    %c0_2 = arith.constant 0 : index
    %0 = vector.load %arg3[%c0, %c0_0, %c0_1, %c0_2] : memref<1x1x2x256xf32, #tpu.memory_space<vmem>>, vector<1x1x2x256xf32>
    %1 = vector.shape_cast %0 : vector<1x1x2x256xf32> to vector<1x2x256xf32>
    %c0_3 = arith.constant 0 : index
    %c0_4 = arith.constant 0 : index
    %c0_5 = arith.constant 0 : index
    %2 = vector.load %arg4[%c0_3, %c0_4, %c0_5] : memref<1x2x256xf32, #tpu.memory_space<vmem>>, vector<1x2x256xf32>
    tpu.vector_store %arg4[%c0_3, %c0_4, %c0_5], %1 {strides = array<i32>} : memref<1x2x256xf32, #tpu.memory_space<vmem>>, vector<1x2x256xf32>,
    return
  }
  func.func @transform_0(%arg0: i32, %arg1: i32, %arg2: i32) -> (i32, i32, i32, i32) {
    %c0_i32 = arith.constant 0 : i32
    %c0_i32_0 = arith.constant 0 : i32
    return %arg0, %arg1, %arg2, %c0_i32 : i32, i32, i32, i32
  }
  func.func @transform_1(%arg0: i32, %arg1: i32, %arg2: i32) -> (i32, i32, i32) {
    %c0_i32 = arith.constant 0 : i32
    return %arg0, %arg2, %arg1 : i32, i32, i32
  }
}

</mosaic_0001>

<llo_original>
// kernel: channel_shuffle.1
$region0: #{channel_shuffle.1}
  #allocation0 [shape = 'u32[]', space=smem, size = 0x4, offset = 0x4, fixed_abs, tag = 'smem constant byte address 0x4 - core index']
  #allocation1 [shape = 'u32[72,128]{1,0:T(1,128)}', space=vmem, size = 0x9000, scoped, tag = 'internal scratch']
  %s0 = inlined_call_operand.vmem [shape: f32[2,2,2,256], index: 0, kind: input, shape index: {}]
  %s1 = inlined_call_operand.vmem [shape: f32[2,2,512], index: 1, kind: output, shape index: {}]
  %s2 = sld [smem:[#allocation0]]
  $region37: #{channel_shuffle.1} parent=0
    _
  %s4 = ssub.s32 1, %s2
  %s5 = scalar_select 0, %s4, %s2
  loop: start=0, step=1, limit=6
  $region2: #{channel_shuffle.1} parent=0 // loop_pre_header
    _
  $region3: #{channel_shuffle.1} parent=0 // loop_header
    %s7 = sphi 0, %s11
    %p8 = scmp.ge.s32.totalorder %s7, 6
    %s14 = sphi 0, %s33
    %s15 = sphi 0, %s29
    %s16 = sphi 0, %s25
    %s17 = sphi 0, %s14
    %s18 = sphi 0, %s15
    %s19 = sphi 0, %s16
    %s20 = sphi 0, %s17
    %s21 = sphi 0, %s18
    %s22 = sphi 0, %s19
    %s40 = sphi 0, %s42
    %s43 = sphi 0, %s40
    %s44 = sphi 0, %s43
    %s60 = sphi 0, %s44
    %s70 = sphi 0, %s72
    %s73 = sphi 0, %s70
    %s74 = sphi 0, %s73
    %s90 = sphi 0, %s74
  $region4: #{channel_shuffle.1} parent=0 // loop_header_branch
    %10 = sbr.rel (%p8) target = $region8
  $region5: #{channel_shuffle.1} parent=0 // loop_body
    %s12 = ssub.s32 %s7, 1
    %s13 = ssub.s32 %s7, 2
    %s23 = sadd.s32 1, %s16
    %p24 = scmp.ge.s32.totalorder %s23, 1
    %s25 = scalar_select %p24, 0, %s23
    %s26 = sadd.s32 1, %s15
    %s27 = scalar_select %p24, %s26, %s15
    %p28 = scmp.ge.s32.totalorder %s27, 2
    %s29 = scalar_select %p28, 0, %s27
    %s30 = sadd.s32 1, %s14
    %s31 = scalar_select %p28, %s30, %s14
    %p32 = scmp.ge.s32.totalorder %s31, 2
    %s33 = scalar_select %p32, 0, %s31
    %s34 = ssub.s32 %s14, %s33
    %s35 = ssub.s32 %s15, %s29
    %s36 = sor.u32 %s34, %s35
    %s37 = ssub.s32 %s16, %s25
    %s38 = sor.u32 %s36, %s37
    %p39 = scmp.eq.s32.totalorder %s38, 0
    %s41 = sadd.s32 %s40, 1
    %s42 = scalar_select %p39, %s40, %s41
    %p45 = pneg %p39
    %p46 = scmp.eq.s32.totalorder %s7, 3
    %p47 = por %p45, %p46
    %p48 = scmp.ne.s32.totalorder %s40, %s43
    %p49 = scmp.eq.s32.totalorder %s7, 0
    %p50 = por %p48, %p49
    %p51 = scmp.ne.s32.totalorder %s40, %s43
    %p52 = scmp.eq.s32.totalorder %s12, 3
    %p53 = por %p51, %p52
    %p54 = scmp.ne.s32.totalorder %s43, %s44
    %p55 = scmp.eq.s32.totalorder %s12, 0
    %p56 = por %p54, %p55
    %p57 = scmp.ne.s32.totalorder %s43, %s44
    %p58 = scmp.eq.s32.totalorder %s13, 3
    %p59 = por %p57, %p58
    %p61 = scmp.ne.s32.totalorder %s44, %s60
    %p62 = scmp.eq.s32.totalorder %s13, 0
    %p63 = por %p61, %p62
    %s64 = ssub.s32 %s14, %s33
    %s65 = ssub.s32 %s16, %s25
    %s66 = sor.u32 %s64, %s65
    %s67 = ssub.s32 %s15, %s29
    %s68 = sor.u32 %s66, %s67
    %p69 = scmp.eq.s32.totalorder %s68, 0
    %s71 = sadd.s32 %s70, 1
    %s72 = scalar_select %p69, %s70, %s71
    %p75 = pneg %p69
    %p76 = scmp.eq.s32.totalorder %s7, 3
    %p77 = por %p75, %p76
    %p78 = scmp.ne.s32.totalorder %s70, %s73
    %p79 = scmp.eq.s32.totalorder %s7, 0
    %p80 = por %p78, %p79
    %p81 = scmp.ne.s32.totalorder %s70, %s73
    %p82 = scmp.eq.s32.totalorder %s12, 3
    %p83 = por %p81, %p82
    %p84 = scmp.ne.s32.totalorder %s73, %s74
    %p85 = scmp.eq.s32.totalorder %s12, 0
    %p86 = por %p84, %p85
    %p87 = scmp.ne.s32.totalorder %s73, %s74
    %p88 = scmp.eq.s32.totalorder %s13, 3
    %p89 = por %p87, %p88
    %p91 = scmp.ne.s32.totalorder %s74, %s90
    %p92 = scmp.eq.s32.totalorder %s13, 0
    %p93 = por %p91, %p92
    %p94 = scmp.le.s32.totalorder 1, %s7
    %p95 = scmp.lt.s32.totalorder %s7, 5
    %p96 = pnand %p94, %p95
    %p97 = pneg %p96
    // Predicated region
    $region9: #{channel_shuffle.1} parent=5 // pred_check
      _
    $region10: #{channel_shuffle.1} parent=5 // pred_check_branch
      %99 = sbr.rel (%p96) target = $region12
    $region11: #{channel_shuffle.1} parent=5 // pred_region
      %s100 = ssub.s32 %s7, 1
    $region12: #{channel_shuffle.1} parent=5 // pred_fallthru
      _
    %p101 = scmp.lt.s32.totalorder %s7, 4
    // Predicated region
    $region13: #{channel_shuffle.1} parent=5 // pred_check
      %p102 = pneg %p101
    $region14: #{channel_shuffle.1} parent=5 // pred_check_branch
      %104 = sbr.rel (%p102) target = $region16
    $region15: #{channel_shuffle.1} parent=5 // pred_region
      // Predicated region
      $region17: #{channel_shuffle.1} parent=15 // pred_check
        %p105 = pneg %p50
      $region18: #{channel_shuffle.1} parent=15 // pred_check_branch
        %107 = sbr.rel (%p105) target = $region20
      $region19: #{channel_shuffle.1} parent=15 // pred_region
        %p108 = scmp.lt.s32.totalorder %s14, 1
        %s109 = scalar_select %p108, %s14, 1
        %p110 = scmp.lt.s32.totalorder %s15, 1
        %s111 = scalar_select %p110, %s15, 1
        %p112 = scmp.lt.s32.totalorder %s16, 0
        %s113 = scalar_select %p112, %s16, 0
        %s114 = smul.addr %s113, 2
        %s115 = smul.addr %s111, 2
        %s116 = sadd.s32 %s114, %s115
        %s117 = smul.addr %s109, 4
        %s118 = sadd.s32 %s116, %s117
        %s119 = smul.addr %s118, 2
        %s120 = scalar_lea.vmem %s0, %s119
      $region20: #{channel_shuffle.1} parent=15 // pred_fallthru
        _
    $region16: #{channel_shuffle.1} parent=5 // pred_fallthru
      _
    %p121 = scmp.le.s32.totalorder 1, %s7
    %p122 = scmp.lt.s32.totalorder %s7, 5
    %p123 = pnand %p121, %p122
    %p124 = pneg %p123
    // Predicated region
    $region21: #{channel_shuffle.1} parent=5 // pred_check
      _
    $region22: #{channel_shuffle.1} parent=5 // pred_check_branch
      %126 = sbr.rel (%p123) target = $region24
    $region23: #{channel_shuffle.1} parent=5 // pred_region
      %s127 = ssub.s32 %s7, 1
      %p128 = scmp.lt.s32.totalorder %s17, 1
      %s129 = scalar_select %p128, %s17, 1
      %p130 = scmp.lt.s32.totalorder %s18, 1
      %s131 = scalar_select %p130, %s18, 1
      %p132 = scmp.lt.s32.totalorder %s19, 0
      %s133 = scalar_select %p132, %s19, 0
      %s134 = smul.addr %s133, 2
      %s135 = smul.addr %s131, 2
      %s136 = sadd.s32 %s134, %s135
      %s137 = smul.addr %s129, 4
      %s138 = sadd.s32 %s136, %s137
      %s139 = smul.addr %s138, 2
      %s140 = scalar_lea.vmem %s0, %s139
      %p141 = pneg %p56
      %p142 = pneg %p53
      %p143 = pneg %p86
      %p144 = pneg %p83
      %s145 = smul.u32 2, %s18
      %p146 = scmp.lt.s32.totalorder %s17, 1
      %s147 = scalar_select %p146, %s17, 1
      %p148 = scmp.lt.s32.totalorder %s19, 0
      %s149 = scalar_select %p148, %s19, 0
      %p150 = scmp.lt.s32.totalorder %s145, 3
      %s151 = scalar_select %p150, %s145, 3
      %s152 = smul.addr %s149, 4
      %s153 = sadd.s32 %s151, %s152
      %s154 = smul.addr %s147, 4
      %s155 = sadd.s32 %s153, %s154
      %s156 = smul.addr %s155, 2
      %s157 = scalar_lea.vmem %s1, %s156
      %p158 = scmp.lt.s32.totalorder %s17, 1
      %s159 = scalar_select %p158, %s17, 1
      %p160 = scmp.lt.s32.totalorder %s18, 1
      %s161 = scalar_select %p160, %s18, 1
      %p162 = scmp.lt.s32.totalorder %s19, 0
      %s163 = scalar_select %p162, %s19, 0
      %s164 = smul.addr %s163, 2
      %s165 = smul.addr %s161, 2
      %s166 = sadd.s32 %s164, %s165
      %s167 = smul.addr %s159, 4
      %s168 = sadd.s32 %s166, %s167
      %s169 = smul.addr %s168, 2
      %s170 = scalar_lea.vmem %s0, %s169
      %s171 = smul.u32 2, %s18
      %p172 = scmp.lt.s32.totalorder %s17, 1
      %s173 = scalar_select %p172, %s17, 1
      %p174 = scmp.lt.s32.totalorder %s19, 0
      %s175 = scalar_select %p174, %s19, 0
      %p176 = scmp.lt.s32.totalorder %s171, 3
      %s177 = scalar_select %p176, %s171, 3
      %s178 = smul.addr %s175, 4
      %s179 = sadd.s32 %s177, %s178
      %s180 = smul.addr %s173, 4
      %s181 = sadd.s32 %s179, %s180
      %s182 = smul.addr %s181, 2
      %s183 = scalar_lea.vmem %s1, %s182
      %s184 = smul.u32 2, %s18
      %v185 = vld [vmem:[%s170] sm:$0xf]
      %186 = vst [vmem:[%s183] sm:$0xf] %v185
      %s187 = smul.u32 2, %s18
      %p188 = scmp.lt.s32.totalorder %s17, 1
      %s189 = scalar_select %p188, %s17, 1
      %p190 = scmp.lt.s32.totalorder %s19, 0
      %s191 = scalar_select %p190, %s19, 0
      %p192 = scmp.lt.s32.totalorder %s187, 3
      %s193 = scalar_select %p192, %s187, 3
      %s194 = smul.addr %s191, 4
      %s195 = sadd.s32 %s193, %s194
      %s196 = smul.addr %s189, 4
      %s197 = sadd.s32 %s195, %s196
      %s198 = smul.addr %s197, 2
      %s199 = scalar_lea.vmem %s1, %s198
      // Predicated region
      $region25: #{channel_shuffle.1} parent=23 // pred_check
        %p200 = pneg %p83
      $region26: #{channel_shuffle.1} parent=23 // pred_check_branch
        %202 = sbr.rel (%p200) target = $region28
      $region27: #{channel_shuffle.1} parent=23 // pred_region
        %s203 = smul.u32 2, %s18
      $region28: #{channel_shuffle.1} parent=23 // pred_fallthru
        _
    $region24: #{channel_shuffle.1} parent=5 // pred_fallthru
      _
    %p204 = scmp.le.s32.totalorder 2, %s7
    // Predicated region
    $region29: #{channel_shuffle.1} parent=5 // pred_check
      %p205 = pneg %p204
    $region30: #{channel_shuffle.1} parent=5 // pred_check_branch
      %207 = sbr.rel (%p205) target = $region32
    $region31: #{channel_shuffle.1} parent=5 // pred_region
      %s208 = ssub.s32 %s7, 2
      // Predicated region
      $region33: #{channel_shuffle.1} parent=31 // pred_check
        %p209 = pneg %p89
      $region34: #{channel_shuffle.1} parent=31 // pred_check_branch
        %211 = sbr.rel (%p209) target = $region36
      $region35: #{channel_shuffle.1} parent=31 // pred_region
        %s212 = smul.u32 2, %s21
        %p213 = scmp.lt.s32.totalorder %s20, 1
        %s214 = scalar_select %p213, %s20, 1
        %p215 = scmp.lt.s32.totalorder %s22, 0
        %s216 = scalar_select %p215, %s22, 0
        %p217 = scmp.lt.s32.totalorder %s212, 3
        %s218 = scalar_select %p217, %s212, 3
        %s219 = smul.addr %s216, 4
        %s220 = sadd.s32 %s218, %s219
        %s221 = smul.addr %s214, 4
        %s222 = sadd.s32 %s220, %s221
        %s223 = smul.addr %s222, 2
        %s224 = scalar_lea.vmem %s1, %s223
      $region36: #{channel_shuffle.1} parent=31 // pred_fallthru
        _
    $region32: #{channel_shuffle.1} parent=5 // pred_fallthru
      _
  $region6: #{channel_shuffle.1} parent=0 // loop_footer
    %s11 = sadd.s32 1, %s7
  $region7: #{channel_shuffle.1} parent=0 // loop_footer_branch
    %6 = sbr.rel target = $region3
  $region8: #{channel_shuffle.1} parent=0 // loop_exit
    _

</llo_original>
